<compile_context>
chip_gen: v7x
topology: tpu7x:2x2x1
jax: 0.10.0
libtpu: 0.0.40
codegen_flags: <defaults>
</compile_context>

<pallas_src>
import functools

import jax
import jax.numpy as jnp
from jax import lax
from jax.experimental import pallas as pl
from jax.experimental.pallas import tpu as pltpu

LANES = 128
SUBLANES = 8


def _num_tensorcores(default=2):
    """Best-effort TensorCores-per-chip (v7x: 2, v5e/v6e: 1)."""
    try:
        info = pltpu.get_tpu_info()
    except Exception:
        return default
    for name in ("num_tensorcores", "tensorcore_count", "num_cores",
                 "num_cores_per_chip", "cores_per_chip", "core_count"):
        v = getattr(info, name, None)
        if v is None:
            continue
        try:
            v = int(v)
        except (TypeError, ValueError):
            continue
        if v > 0:
            return v
    return default


def _focal_loss_kernel(x_ref, t_ref, out_ref, *, alpha, gamma, tile, steps,
                       nblocks, valid_rows, rem, need_mask, binary_targets):
    ci = pl.program_id(0)        # "core" slice (parallel axis)
    j = pl.program_id(1)         # reduction step (arbitrary axis)
    b = ci * steps + j           # logical block id in row space
    last = nblocks - 1

    @pl.when(j == 0)
    def _init():
        out_ref[...] = jnp.zeros_like(out_ref)

    x = x_ref[...].astype(jnp.float32)
    t = t_ref[...].astype(jnp.float32)

    # Numerically-stable BCE-with-logits (PyTorch formulation) -- always exact.
    e = jnp.exp(-jnp.abs(x))                              # EUP
    bce = jnp.maximum(x, 0.0) - x * t + jnp.log1p(e)      # EUP (log1p)
    if binary_targets:
        # pt = exp(-BCE) without the second exp (exact for t in {0,1}):
        #   exp(-(max(x,0) - x*t)) == 1 if sign(x) "matches" t else e
        #   exp(-log1p(e))         == 1 / (1 + e)   (approx EUP reciprocal)
        match = (x >= 0.0) == (t > 0.5)
        pt = jnp.where(match, 1.0, e) * pl.reciprocal(1.0 + e, approx=True)
    else:
        pt = jnp.exp(-bce)                                # EUP

    omp = 1.0 - pt
    g = float(gamma)
    if g == 2.0:
        w = omp * omp                       # fast path, no pow / NaN hazard
    elif g == float(int(g)) and g >= 0.0:
        w = lax.integer_pow(omp, int(g))
    else:
        w = jnp.maximum(omp, 0.0) ** g
    fl = w * bce
    if float(alpha) != 1.0:                 # skip the multiply for alpha == 1
        fl = float(alpha) * fl

    def _accum(v):
        # Vreg-shaped partial sum: pure VPU adds, no per-step cross-lane reduce.
        out_ref[...] += v.reshape(tile // SUBLANES, SUBLANES, LANES).sum(axis=0)[None]

    if nblocks > 1:
        @pl.when(b < last)                  # interior blocks: no masking at all
        def _full():
            _accum(fl)

    @pl.when(b == last)                     # blocks with b > last are skipped
    def _tail():
        if need_mask:
            # Two-level (row, lane) mask: no int32 flat-index overflow; SELECT so
            # garbage / zero-padded elements are fully discarded (even NaN/Inf).
            grow = b * tile + lax.broadcasted_iota(jnp.int32, (tile, LANES), 0)
            lane = lax.broadcasted_iota(jnp.int32, (tile, LANES), 1)
            valid = (grow < valid_rows) | ((grow == valid_rows) & (lane < rem))
            _accum(jnp.where(valid, fl, 0.0))
        else:
            _accum(fl)


def focal_loss(inputs, targets, alpha=1.0, gamma=2.0, reduction="mean",
               row_tile=4096, num_cores=None, binary_targets=False):
    """Pallas TPU focal loss. inputs/targets share an arbitrary shape (e.g. NCHW).

    binary_targets=True enables a faster path (one fewer full transcendental)
    that is exact only when every target is 0 or 1, up to the ~1e-4 relative
    error of the approximate EUP reciprocal.
    """
    assert inputs.shape == targets.shape
    if reduction not in ("mean", "sum"):
        # TODO(synk): reduction='none' (per-element loss output) not wired up.
        raise NotImplementedError("reduction must be 'mean' or 'sum'")

    n_elems = int(inputs.size)
    if n_elems == 0:
        return jnp.float32(jnp.nan) if reduction == "mean" else jnp.float32(0.0)

    itemsize = jnp.dtype(inputs.dtype).itemsize
    sub = {4: SUBLANES, 2: 2 * SUBLANES, 1: 4 * SUBLANES}.get(itemsize, SUBLANES)

    rem = n_elems % LANES                   # elements in the last partial row
    valid_rows = n_elems // LANES           # rows where every lane is valid
    rows = valid_rows + (1 if rem else 0)
    rows2d = max(rows, sub)                 # rows of the 2-D view given to Pallas
    pad = rows2d * LANES - n_elems

    x = inputs.reshape(-1)
    t = targets.reshape(-1)
    if pad:
        # Only hit when n_elems is not a multiple of 128 (or the array is tiny):
        # pad to the next full row; padded elements are masked out in-kernel.
        # TODO(synk): for huge inputs with n_elems % 128 != 0 this still copies
        # the whole array; the <128-element tail could go to a tiny side slab.
        x = jnp.pad(x, (0, pad))
        t = jnp.pad(t, (0, pad))
    x2 = x.reshape(rows2d, LANES)
    t2 = t.reshape(rows2d, LANES)

    # Row tile: as big as possible (HBM streaming), multiple of the sublane
    # packing for this dtype, never larger than the array (ragged last block OK).
    tile = max(sub, (min(int(row_tile), rows2d) // sub) * sub)
    nblocks = -(-rows2d // tile)

    # Megacore split (v7x): each TensorCore streams a contiguous slice of the
    # rows into its own accumulator slab. Collapses to 1 on single-TC chips.
    c = int(num_cores) if num_cores is not None else _num_tensorcores(default=2)
    c = max(1, min(c, nblocks))
    steps = -(-nblocks // c)

    # Mask needed only if the grid's logical coverage exceeds n_elems; it is
    # applied only inside the single tail block.
    need_mask = (nblocks * tile * LANES) != n_elems

    if c * steps > nblocks:
        # nblocks does not factor as c*steps: clamp the (at most one) extra block
        # to an in-bounds DMA; the kernel skips its accumulation (b > last).
        def idx_map(ci, j):
            return (jnp.minimum(ci * steps + j, nblocks - 1), 0)
    else:
        def idx_map(ci, j):
            return (ci * steps + j, 0)

    kernel = functools.partial(
        _focal_loss_kernel, alpha=float(alpha), gamma=float(gamma), tile=tile,
        steps=steps, nblocks=nblocks, valid_rows=valid_rows, rem=rem,
        need_mask=need_mask, binary_targets=bool(binary_targets))

    cparams = dict(dimension_semantics=("parallel", "arbitrary"))
    vmem_need = 2 * 2 * tile * LANES * itemsize + (1 << 20)   # 2 inputs x 2 bufs
    if vmem_need > (14 << 20):
        cparams["vmem_limit_bytes"] = min(vmem_need + (8 << 20), 64 << 20)

    partials = pl.pallas_call(
        kernel,
        out_shape=jax.ShapeDtypeStruct((c, SUBLANES, LANES), jnp.float32),
        grid_spec=pltpu.PrefetchScalarGridSpec(
            num_scalar_prefetch=0,
            grid=(c, steps),
            in_specs=[pl.BlockSpec((tile, LANES), idx_map),
                      pl.BlockSpec((tile, LANES), idx_map)],
            out_specs=pl.BlockSpec((1, SUBLANES, LANES), lambda ci, j: (ci, 0, 0)),
        ),
        compiler_params=pltpu.CompilerParams(**cparams),
    )(x2, t2)

    total = jnp.sum(partials)
    if reduction == "mean":
        return total / jnp.float32(n_elems)
    return total  # 'sum'


def focal_loss_ref(inputs, targets, alpha=1.0, gamma=2.0, reduction="mean"):
    x = inputs.astype(jnp.float32)
    t = targets.astype(jnp.float32)
    bce = jnp.maximum(x, 0.0) - x * t + jnp.log1p(jnp.exp(-jnp.abs(x)))
    pt = jnp.exp(-bce)
    fl = alpha * (1.0 - pt) ** gamma * bce
    return jnp.mean(fl) if reduction == "mean" else jnp.sum(fl)


if __name__ == "__main__":
    key = jax.random.PRNGKey(0)
    ks = jax.random.split(key, 8)

    def check(out, ref, rtol, atol=1e-6):
        jax.block_until_ready(out)
        assert jnp.allclose(out, ref, rtol=rtol, atol=atol), (out, ref)

    # 1) Canonical NCHW logits / binary targets (2048 elems = 16 x 128 rows):
    #    zero-copy reshape, single block, no masking.
    x = jax.random.normal(ks[0], (2, 4, 16, 16), dtype=jnp.float32)
    tg = (jax.random.uniform(ks[1], (2, 4, 16, 16)) > 0.5).astype(jnp.float32)
    ref = focal_loss_ref(x, tg)
    check(focal_loss(x, tg), ref, rtol=1e-5)

    # reduction='sum'
    check(focal_loss(x, tg, reduction="sum"),
          focal_loss_ref(x, tg, reduction="sum"), rtol=1e-5, atol=1e-3)

    # bf16 ingestion (halves HBM bytes; cast to f32 happens in VMEM).
    check(focal_loss(x.astype(jnp.bfloat16), tg.astype(jnp.bfloat16)),
          focal_loss_ref(x.astype(jnp.bfloat16), tg.astype(jnp.bfloat16)),
          rtol=1e-5)

    # Binary-target fast path (one fewer full transcendental, approx reciprocal).
    check(focal_loss(x, tg, binary_targets=True), ref, rtol=5e-3, atol=1e-4)

    # 2) Ragged element count (1155, not a multiple of 128): padded tail row +
    #    element-level mask in the tail block.
    x2 = jax.random.normal(ks[2], (3, 5, 7, 11), dtype=jnp.float32)
    t2 = (jax.random.uniform(ks[3], (3, 5, 7, 11)) > 0.5).astype(jnp.float32)
    check(focal_loss(x2, t2), focal_loss_ref(x2, t2), rtol=1e-5)

    # 3) Multi-block streaming grid with a ragged (unpadded) last block and a
    #    forced 2-core split: 900 rows, tile=128 -> 8 blocks, last block has
    #    only 4 valid rows (masked in-kernel, no wrapper pad).
    x3 = jax.random.normal(ks[4], (3, 300, 128), dtype=jnp.float32)
    t3 = (jax.random.uniform(ks[5], (3, 300, 128)) > 0.5).astype(jnp.float32)
    check(focal_loss(x3, t3, row_tile=128, num_cores=2),
          focal_loss_ref(x3, t3), rtol=1e-4)

    # 4) Odd block count with the 2-core split: 640 rows, tile=128 -> 5 blocks,
    #    c*steps = 6 -> exercises the clamped, skipped extra block.
    x4 = jax.random.normal(ks[6], (640, 128), dtype=jnp.float32)
    t4 = (jax.random.uniform(ks[7], (640, 128)) > 0.5).astype(jnp.float32)
    check(focal_loss(x4, t4, row_tile=128, num_cores=2),
          focal_loss_ref(x4, t4), rtol=1e-4)

    print("KERNEL_OK")
</pallas_src>

<mosaic_0001>
module attributes {stable_mosaic.version = 11 : i64} {
  func.func @_focal_loss_kernel(%arg0: i32, %arg1: i32, %arg2: memref<16x128xf32, #tpu.memory_space<vmem>>, %arg3: memref<16x128xf32, #tpu.memory_space<vmem>>, %arg4: memref<1x8x128xf32, #tpu.memory_space<vmem>>) attributes {dimension_semantics = [#tpu.dimension_semantics<parallel>, #tpu.dimension_semantics<arbitrary>], iteration_bounds = array<i64: 1, 1>, scalar_prefetch = 0 : i64, scratch_operands = 0 : i64, tpu.core_type = #tpu.core_type<tc>, window_params = [{transform_indices = @transform_0, window_bounds = array<i64: 16, 128>}, {transform_indices = @transform_1, window_bounds = array<i64: 16, 128>}, {transform_indices = @transform_2, window_bounds = array<i64: 1, 8, 128>}]} {
    %c1_i32 = arith.constant 1 : i32
    %0 = arith.muli %arg0, %c1_i32 : i32
    %1 = arith.addi %0, %arg1 : i32
    %c0_i32 = arith.constant 0 : i32
    %2 = arith.cmpi eq, %arg1, %c0_i32 : i32
    %3 = arith.extui %2 : i1 to i32
    %c0_i32_0 = arith.constant 0 : i32
    %4 = arith.cmpi ne, %3, %c0_i32_0 : i32
    scf.if %4 {
      %cst_9 = arith.constant 0.000000e+00 : f32
      %27 = vector.broadcast %cst_9 : f32 to vector<1x8x128xf32>
      %c0_10 = arith.constant 0 : index
      %c0_11 = arith.constant 0 : index
      %c0_12 = arith.constant 0 : index
      %28 = vector.load %arg4[%c0_10, %c0_11, %c0_12] : memref<1x8x128xf32, #tpu.memory_space<vmem>>, vector<1x8x128xf32>
      tpu.vector_store %arg4[%c0_10, %c0_11, %c0_12], %27 {strides = array<i32>} : memref<1x8x128xf32, #tpu.memory_space<vmem>>, vector<1x8x128xf32>,
    } else {
    }
    %c0 = arith.constant 0 : index
    %c0_1 = arith.constant 0 : index
    %5 = vector.load %arg2[%c0, %c0_1] : memref<16x128xf32, #tpu.memory_space<vmem>>, vector<16x128xf32>
    %c0_2 = arith.constant 0 : index
    %c0_3 = arith.constant 0 : index
    %6 = vector.load %arg3[%c0_2, %c0_3] : memref<16x128xf32, #tpu.memory_space<vmem>>, vector<16x128xf32>
    %7 = math.absf %5 : vector<16x128xf32>
    %cst = arith.constant 0.000000e+00 : f32
    %8 = vector.broadcast %cst : f32 to vector<16x128xf32>
    %9 = arith.subf %8, %7 : vector<16x128xf32>
    %10 = math.exp %9 : vector<16x128xf32>
    %cst_4 = arith.constant 0.000000e+00 : f32
    %11 = vector.broadcast %cst_4 : f32 to vector<16x128xf32>
    %12 = arith.maximumf %5, %11 : vector<16x128xf32>
    %13 = arith.mulf %5, %6 : vector<16x128xf32>
    %14 = arith.subf %12, %13 : vector<16x128xf32>
    %15 = math.log1p %10 : vector<16x128xf32>
    %16 = arith.addf %14, %15 : vector<16x128xf32>
    %cst_5 = arith.constant 0.000000e+00 : f32
    %17 = vector.broadcast %cst_5 : f32 to vector<16x128xf32>
    %18 = arith.subf %17, %16 : vector<16x128xf32>
    %19 = math.exp %18 : vector<16x128xf32>
    %cst_6 = arith.constant 1.000000e+00 : f32
    %20 = vector.broadcast %cst_6 : f32 to vector<16x128xf32>
    %21 = arith.subf %20, %19 : vector<16x128xf32>
    %22 = arith.mulf %21, %21 : vector<16x128xf32>
    %23 = arith.mulf %22, %16 : vector<16x128xf32>
    %c0_i32_7 = arith.constant 0 : i32
    %24 = arith.cmpi eq, %1, %c0_i32_7 : i32
    %25 = arith.extui %24 : i1 to i32
    %c0_i32_8 = arith.constant 0 : i32
    %26 = arith.cmpi ne, %25, %c0_i32_8 : i32
    scf.if %26 {
      %c0_9 = arith.constant 0 : index
      %c0_10 = arith.constant 0 : index
      %c0_11 = arith.constant 0 : index
      %27 = vector.load %arg4[%c0_9, %c0_10, %c0_11] : memref<1x8x128xf32, #tpu.memory_space<vmem>>, vector<1x8x128xf32>
      %28 = vector.shape_cast %23 : vector<16x128xf32> to vector<2x8x128xf32>
      %cst_12 = arith.constant dense<0.000000e+00> : vector<8x128xf32>
      %29 = vector.multi_reduction <add>, %28, %cst_12 [0] : vector<2x8x128xf32> to vector<8x128xf32>
      %30 = vector.shape_cast %29 : vector<8x128xf32> to vector<1x8x128xf32>
      %31 = arith.addf %27, %30 : vector<1x8x128xf32>
      %c0_13 = arith.constant 0 : index
      %c0_14 = arith.constant 0 : index
      %c0_15 = arith.constant 0 : index
      %32 = vector.load %arg4[%c0_13, %c0_14, %c0_15] : memref<1x8x128xf32, #tpu.memory_space<vmem>>, vector<1x8x128xf32>
      tpu.vector_store %arg4[%c0_13, %c0_14, %c0_15], %31 {strides = array<i32>} : memref<1x8x128xf32, #tpu.memory_space<vmem>>, vector<1x8x128xf32>,
    } else {
    }
    return
  }
  func.func @transform_0(%arg0: i32, %arg1: i32) -> (i32, i32) {
    %c1_i32 = arith.constant 1 : i32
    %0 = arith.muli %arg0, %c1_i32 : i32
    %1 = arith.addi %0, %arg1 : i32
    %c0_i32 = arith.constant 0 : i32
    %c0_i32_0 = arith.constant 0 : i32
    return %1, %c0_i32 : i32, i32
  }
  func.func @transform_1(%arg0: i32, %arg1: i32) -> (i32, i32) {
    %c1_i32 = arith.constant 1 : i32
    %0 = arith.muli %arg0, %c1_i32 : i32
    %1 = arith.addi %0, %arg1 : i32
    %c0_i32 = arith.constant 0 : i32
    %c0_i32_0 = arith.constant 0 : i32
    return %1, %c0_i32 : i32, i32
  }
  func.func @transform_2(%arg0: i32, %arg1: i32) -> (i32, i32, i32) {
    %c0_i32 = arith.constant 0 : i32
    %c0_i32_0 = arith.constant 0 : i32
    %c0_i32_1 = arith.constant 0 : i32
    return %arg0, %c0_i32, %c0_i32_0 : i32, i32, i32
  }
}

</mosaic_0001>

<llo_original>
// kernel: tpu_custom_call.1
$region0: #{tpu_custom_call.1}
  #allocation0 [shape = 'u32[]', space=smem, size = 0x4, offset = 0x4, fixed_abs, tag = 'smem constant byte address 0x4 - core index']
  #allocation1 [shape = 'u32[144,128]{1,0:T(1,128)}', space=vmem, size = 0x12000, scoped, tag = 'internal scratch']
  %s0 = inlined_call_operand.hbm [shape: f32[16,128], index: 0, kind: input, shape index: {}]
  %s1 = inlined_call_operand.hbm [shape: f32[16,128], index: 1, kind: input, shape index: {}]
  %s2 = inlined_call_operand.hbm [shape: f32[1,8,128], index: 2, kind: output, shape index: {}]
  %s3 = sld [smem:[#allocation0]]
  $region34: #{tpu_custom_call.1} parent=0
    _
  %s5 = ssub.s32 1, %s3
  %s6 = scalar_select 0, %s5, %s3
  $region1: #{tpu_custom_call.1} parent=0
    #allocation2 [shape = 'u8[8192]{0}', space=vmem, size = 0x2000, scoped, tag = 'input window, operand 0, single buffered']
    #allocation3 [shape = 's32[1]{0}', space=sflag, size = 0x4, scoped, tag = 'scoped memory for tpu_custom_call.1']
    #allocation4 [shape = 's32[1]{0}', space=sflag, size = 0x4, scoped, tag = 'scoped memory for tpu_custom_call.1']
    #allocation5 [shape = 'u8[8192]{0}', space=vmem, size = 0x2000, scoped, tag = 'input window, operand 1, single buffered']
    #allocation6 [shape = 's32[1]{0}', space=sflag, size = 0x4, scoped, tag = 'scoped memory for tpu_custom_call.1']
    #allocation7 [shape = 'u8[4096]{0}', space=vmem, size = 0x1000, scoped, tag = 'output window, operand 0, single buffered']
    %7 = vsyncpa [#allocation3], 0
    %8 = vsyncpa [#allocation6], 0
    %9 = vsyncpa [#allocation4], 0
    // Predicated region
    $region2: #{tpu_custom_call.1} parent=1 // pred_check
      _
    $region3: #{tpu_custom_call.1} parent=1 // pred_check_branch
      %11 = sbr.rel (0) target = $region5
    $region4: #{tpu_custom_call.1} parent=1 // pred_region
      %s12 = sadd.s32 0, 0
      %s13 = smul.u32 2, %s12
      %s15 = ssub.s32 256, 256
      %16 = vsyncadd [#allocation3], %s15
      %s17 = smul.addr %s13, 128
      %s18 = scalar_lea.hbm %s0, %s17
      %s19 = sshll.u32 [#allocation2], 4
      %s20 = int_to_ptr.vmem [resolvable:$true] %s19
      %25 = dma.hbm_to_vmem [thread:$0]  %s18, 256, %s20, [#allocation3], 128, 128, 8
    $region5: #{tpu_custom_call.1} parent=1 // pred_fallthru
      _
    // Predicated region
    $region6: #{tpu_custom_call.1} parent=1 // pred_check
      _
    $region7: #{tpu_custom_call.1} parent=1 // pred_check_branch
      %27 = sbr.rel (0) target = $region9
    $region8: #{tpu_custom_call.1} parent=1 // pred_region
      %s28 = sadd.s32 0, 0
      %s29 = smul.u32 2, %s28
      %s31 = ssub.s32 256, 256
      %32 = vsyncadd [#allocation6], %s31
      %s33 = smul.addr %s29, 128
      %s34 = scalar_lea.hbm %s1, %s33
      %s35 = sshll.u32 [#allocation5], 4
      %s36 = int_to_ptr.vmem [resolvable:$true] %s35
      %41 = dma.hbm_to_vmem [thread:$0]  %s34, 256, %s36, [#allocation6], 128, 128, 8
    $region9: #{tpu_custom_call.1} parent=1 // pred_fallthru
      _
    // Predicated region
    $region10: #{tpu_custom_call.1} parent=1 // pred_check
      _
    $region11: #{tpu_custom_call.1} parent=1 // pred_check_branch
      %43 = sbr.rel (0) target = $region13
    $region12: #{tpu_custom_call.1} parent=1 // pred_region
      %44 = dma.done [#allocation3], 256
    $region13: #{tpu_custom_call.1} parent=1 // pred_fallthru
      _
    // Predicated region
    $region14: #{tpu_custom_call.1} parent=1 // pred_check
      _
    $region15: #{tpu_custom_call.1} parent=1 // pred_check_branch
      %46 = sbr.rel (0) target = $region17
    $region16: #{tpu_custom_call.1} parent=1 // pred_region
      %47 = dma.done [#allocation6], 256
    $region17: #{tpu_custom_call.1} parent=1 // pred_fallthru
      _
    %s48 = sadd.s32 0, 0
    %s49 = smul.u32 2, %s48
    %s50 = sadd.s32 0, 0
    %s51 = smul.u32 2, %s50
    %s52 = sadd.s32 0, 0
    %p53 = scmp.eq.s32.totalorder 0, 0
    // Predicated region
    $region18: #{tpu_custom_call.1} parent=1 // pred_check
      %p54 = pneg %p53
    $region19: #{tpu_custom_call.1} parent=1 // pred_check_branch
      %56 = sbr.rel (%p54) target = $region21
    $region20: #{tpu_custom_call.1} parent=1 // pred_region
      %57 = vst [vmem:[#allocation7] sm:$0xff] 0.0
    $region21: #{tpu_custom_call.1} parent=1 // pred_fallthru
      _
    %v58 = vld [vmem:[#allocation2] sm:$0xff]
    %v59 = vld [vmem:[#allocation2 + $0x8] sm:$0xff]
    %v60 = vld [vmem:[#allocation5] sm:$0xff]
    %v61 = vld [vmem:[#allocation5 + $0x8] sm:$0xff]
    %v62 = vand.u32 2147483647, %v58
    %v63 = vand.u32 2147483647, %v59
    %v64 = vsub.f32 0.0, %v62
    %v65 = vsub.f32 0.0, %v63
    %v66 = vmul.f32 %v64, 1.442695
    %v67 = vpow.pop %v66
    %v68 = vmul.f32 %v65, 1.442695
    %v69 = vpow.pop %v68
    %v70 = vmax.f32 %v58, 0.0
    %v71 = vmax.f32 %v59, 0.0
    %v72 = vmul.f32 %v58, %v60
    %v73 = vmul.f32 %v59, %v61
    %v74 = vsub.f32 %v70, %v72
    %v75 = vsub.f32 %v71, %v73
    %v76 = vadd.f32 %v67, 1.0
    %v77 = vlog2.pop %v76
    %v78 = vmul.f32 %v77, 0.6931472
    %v79 = vmul.f32 -0.5, %v67
    %v80 = vadd.f32 %v79, 1.0
    %v81 = vmul.f32 %v80, %v67
    %v82 = vand.u32 2147483647, %v67
    %vm83 = vcmp.lt.f32.partialorder %v82, 0.0004427343
    %v84 = vsel %vm83, %v81, %v78
    %v85 = vadd.f32 %v69, 1.0
    %v86 = vlog2.pop %v85
    %v87 = vmul.f32 %v86, 0.6931472
    %v88 = vmul.f32 -0.5, %v69
    %v89 = vadd.f32 %v88, 1.0
    %v90 = vmul.f32 %v89, %v69
    %v91 = vand.u32 2147483647, %v69
    %vm92 = vcmp.lt.f32.partialorder %v91, 0.0004427343
    %v93 = vsel %vm92, %v90, %v87
    %v94 = vadd.f32 %v74, %v84
    %v95 = vadd.f32 %v75, %v93
    %v96 = vsub.f32 0.0, %v94
    %v97 = vsub.f32 0.0, %v95
    %v98 = vmul.f32 %v96, 1.442695
    %v99 = vpow.pop %v98
    %v100 = vmul.f32 %v97, 1.442695
    %v101 = vpow.pop %v100
    %v102 = vsub.f32 1.0, %v99
    %v103 = vsub.f32 1.0, %v101
    %v104 = vmul.f32 %v102, %v102
    %v105 = vmul.f32 %v103, %v103
    %v106 = vmul.f32 %v104, %v94
    %v107 = vmul.f32 %v105, %v95
    %p108 = scmp.eq.s32.totalorder %s52, 0
    // Predicated region
    $region22: #{tpu_custom_call.1} parent=1 // pred_check
      %p109 = pneg %p108
    $region23: #{tpu_custom_call.1} parent=1 // pred_check_branch
      %111 = sbr.rel (%p109) target = $region25
    $region24: #{tpu_custom_call.1} parent=1 // pred_region
      %v112 = vld [vmem:[#allocation7] sm:$0xff]
      %v113 = vadd.f32 %v106, %v107
      %v114 = vadd.f32 %v112, %v113
      %115 = vst [vmem:[#allocation7] sm:$0xff] %v114
    $region25: #{tpu_custom_call.1} parent=1 // pred_fallthru
      _
    // Predicated region
    $region26: #{tpu_custom_call.1} parent=1 // pred_check
      _
    $region27: #{tpu_custom_call.1} parent=1 // pred_check_branch
      %117 = sbr.rel (0) target = $region29
    $region28: #{tpu_custom_call.1} parent=1 // pred_region
      %s119 = ssub.s32 128, 128
      %120 = vsyncadd [#allocation4], %s119
      %s122 = sshll.u32 [#allocation7], 4
      %s123 = int_to_ptr.vmem [resolvable:$true] %s122
      %125 = dma.vmem_to_hbm [thread:$0]  %s123, 128, %s2, [#allocation4]
    $region29: #{tpu_custom_call.1} parent=1 // pred_fallthru
      _
    // Predicated region
    $region30: #{tpu_custom_call.1} parent=1 // pred_check
      _
    $region31: #{tpu_custom_call.1} parent=1 // pred_check_branch
      %127 = sbr.rel (0) target = $region33
    $region32: #{tpu_custom_call.1} parent=1 // pred_region
      %128 = dma.done [#allocation4], 128
    $region33: #{tpu_custom_call.1} parent=1 // pred_fallthru
      _
    %129 = vsyncpa [#allocation3], 1
    %130 = vsyncpa [#allocation6], 1
    %131 = vsyncpa [#allocation4], 1

</llo_original>
